<compile_context>
chip_gen: v7x
topology: tpu7x:2x2x1
jax: 0.10.0
libtpu: 0.0.40
codegen_flags: <defaults>
</compile_context>

<pallas_src>
import functools

import jax
import jax.numpy as jnp
from jax import lax
from jax.experimental import pallas as pl
from jax.experimental.pallas import tpu as pltpu


_EPS = 1e-8


def _infonce_row_kernel(rows_ref, cols_ref, partner_ref, out_ref):
    """Grid = (row_blocks, col_blocks) over the (2N, 2N) Gram matrix."""
    j = pl.program_id(1)

    s_rows = rows_ref[...].astype(jnp.float32) + _EPS            # (TM, D)
    s_cols = cols_ref[...].astype(jnp.float32) + _EPS            # (TN, D)

    # Gram tile: contract over D on the MXU, no transpose materialized.
    g = lax.dot_general(s_rows, s_cols, (((1,), (1,)), ((), ())),
                        preferred_element_type=jnp.float32)      # (TM, TN)
    part = jnp.sum(g, axis=1, keepdims=True)                     # (TM, 1)

    @pl.when(j == 0)
    def _():
        out_ref[...] = jnp.zeros_like(out_ref)

    # Accumulate row sums of the Gram across the column (reduction) axis.
    out_ref[...] += part

    @pl.when(j == pl.num_programs(1) - 1)
    def _():
        s_part = partner_ref[...].astype(jnp.float32) + _EPS     # (TM, D)
        # G[r, r] = ||S[r]||^2  : self-similarity diagonal to exclude.
        diag = jnp.sum(s_rows * s_rows, axis=1, keepdims=True)   # (TM, 1)
        # G[r, (r+N) mod 2N] = <S[r], S[partner(r)]> : the CE target logit.
        tgt = jnp.sum(s_rows * s_part, axis=1, keepdims=True)    # (TM, 1)
        # per-row loss = logsumexp(row logits) - target logit
        #              = log(rowsum - diag) - log(target)
        out_ref[...] = jnp.log(out_ref[...] - diag) - jnp.log(tgt)


def _pick_tile(candidates, total):
    for c in candidates:
        if c <= total and total % c == 0:
            return c
    return None


@functools.partial(jax.jit, static_argnames=("bound", "subsample", "tm", "tn"))
def custom_infonce(anchor_rec, positive_rec, *, bound=False, subsample=False,
                   tm=None, tn=None):
    """Forward pass of Custom_InfoNCE (bound=False, subsample=False)."""
    if bound or subsample:
        # TODO(synk): bound=True branch (elementwise (N,D,N) products + Python
        # list_index diagonal gather + mean/log reduction) and subsample=True
        # (Python random.shuffle of feature indices) are not implemented here;
        # only the standard bound=False, subsample=False InfoNCE path is.
        raise NotImplementedError("only bound=False, subsample=False is implemented")

    assert anchor_rec.shape == positive_rec.shape and anchor_rec.ndim == 2
    n, d = anchor_rec.shape
    # TODO(synk): pad batches that are not a multiple of 8 (sublane tiling).
    assert n % 8 == 0, "batch size must be a multiple of 8"

    if tm is None:
        tm = _pick_tile((256, 128, 64, 32, 16, 8), n)        # must divide N
    if tn is None:
        tn = _pick_tile((1024, 512, 256, 128, 64, 32, 16, 8), 2 * n)
    assert tm is not None and n % tm == 0 and tm % 8 == 0
    assert tn is not None and (2 * n) % tn == 0 and tn % 8 == 0

    n_row_blocks = (2 * n) // tm
    n_col_blocks = (2 * n) // tn
    half_blocks = n // tm   # row-block offset of a row's positive partner

    s = jnp.concatenate([anchor_rec.astype(jnp.float32),
                         positive_rec.astype(jnp.float32)], axis=0)  # (2N, D)

    row_spec = pl.BlockSpec((tm, d), lambda i, j: (i, 0))
    col_spec = pl.BlockSpec((tn, d), lambda i, j: (j, 0))
    partner_spec = pl.BlockSpec(
        (tm, d), lambda i, j: ((i + half_blocks) % n_row_blocks, 0))
    out_spec = pl.BlockSpec((tm, 1), lambda i, j: (i, 0))

    per_row_loss = pl.pallas_call(
        _infonce_row_kernel,
        out_shape=jax.ShapeDtypeStruct((2 * n, 1), jnp.float32),
        grid_spec=pltpu.PrefetchScalarGridSpec(
            num_scalar_prefetch=0,
            grid=(n_row_blocks, n_col_blocks),
            in_specs=[row_spec, col_spec, partner_spec],
            out_specs=out_spec,
        ),
        compiler_params=pltpu.CompilerParams(
            dimension_semantics=("parallel", "arbitrary")),
    )(s, s, s)

    # 0.5 * (mean over term-1 rows + mean over term-2 rows)
    return jnp.sum(per_row_loss) * (0.5 / n)


def _reference_infonce(anchor_rec, positive_rec):
    """Pure-JAX reference mirroring the PyTorch module (bound/subsample False)."""
    eps = 1e-8
    a = anchor_rec.astype(jnp.float32) + eps
    p = positive_rec.astype(jnp.float32) + eps
    n = a.shape[0]
    s11 = jnp.log(a @ a.T)
    s22 = jnp.log(p @ p.T)
    s12 = jnp.log(a @ p.T)
    s21 = jnp.log(p @ a.T)
    diag = jnp.eye(n, dtype=bool)

    def ce(pos, self_sim):
        logits = jnp.concatenate([pos, jnp.where(diag, -jnp.inf, self_sim)], axis=1)
        lse = jax.scipy.special.logsumexp(logits, axis=1)
        return jnp.mean(lse - jnp.diagonal(pos))

    return 0.5 * (ce(s12, s11) + ce(s21, s22))


if __name__ == "__main__":
    key = jax.random.PRNGKey(0)
    k1, k2, k3, k4 = jax.random.split(key, 4)

    # anchor_rec / positive_rec are probability-like (positive) features in the
    # original model, so sample strictly positive values (log stays finite).
    n, dfeat = 8, 32   # batch_size=8, feature dim=32
    anchor = jax.random.uniform(k1, (n, dfeat), jnp.float32, 0.05, 1.0)
    positive = jax.random.uniform(k2, (n, dfeat), jnp.float32, 0.05, 1.0)

    loss = jax.block_until_ready(custom_infonce(anchor, positive))
    ref = jax.block_until_ready(_reference_infonce(anchor, positive))
    assert bool(jnp.isfinite(loss)), "loss is not finite"
    assert bool(jnp.allclose(loss, ref, rtol=1e-3, atol=1e-3)), (loss, ref)

    # Slightly larger case with small tiles to exercise the blocked grid
    # (8 row blocks x 4 column blocks), the column-axis accumulation and the
    # partner-block indexing.
    n2, d2 = 32, 16
    a2 = jax.random.uniform(k3, (n2, d2), jnp.float32, 0.05, 1.0)
    p2 = jax.random.uniform(k4, (n2, d2), jnp.float32, 0.05, 1.0)
    loss2 = jax.block_until_ready(custom_infonce(a2, p2, tm=8, tn=16))
    ref2 = jax.block_until_ready(_reference_infonce(a2, p2))
    assert bool(jnp.isfinite(loss2)), "loss2 is not finite"
    assert bool(jnp.allclose(loss2, ref2, rtol=1e-3, atol=1e-3)), (loss2, ref2)

    print("KERNEL_OK")
</pallas_src>

<mosaic_0001>
module attributes {stable_mosaic.version = 11 : i64} {
  func.func @_infonce_row_kernel(%arg0: i32, %arg1: i32, %arg2: memref<8x32xf32, #tpu.memory_space<vmem>>, %arg3: memref<16x32xf32, #tpu.memory_space<vmem>>, %arg4: memref<8x32xf32, #tpu.memory_space<vmem>>, %arg5: memref<8x1xf32, #tpu.memory_space<vmem>>) attributes {dimension_semantics = [#tpu.dimension_semantics<parallel>, #tpu.dimension_semantics<arbitrary>], iteration_bounds = array<i64: 2, 1>, scalar_prefetch = 0 : i64, scratch_operands = 0 : i64, tpu.core_type = #tpu.core_type<tc>, window_params = [{transform_indices = @transform_0, window_bounds = array<i64: 8, 32>}, {transform_indices = @transform_1, window_bounds = array<i64: 16, 32>}, {transform_indices = @transform_2, window_bounds = array<i64: 8, 32>}, {transform_indices = @transform_3, window_bounds = array<i64: 8, 1>}]} {
    %c0 = arith.constant 0 : index
    %c0_0 = arith.constant 0 : index
    %0 = vector.load %arg2[%c0, %c0_0] : memref<8x32xf32, #tpu.memory_space<vmem>>, vector<8x32xf32>
    %cst = arith.constant 9.99999993E-9 : f32
    %1 = vector.broadcast %cst : f32 to vector<8x32xf32>
    %2 = arith.addf %0, %1 : vector<8x32xf32>
    %c0_1 = arith.constant 0 : index
    %c0_2 = arith.constant 0 : index
    %3 = vector.load %arg3[%c0_1, %c0_2] : memref<16x32xf32, #tpu.memory_space<vmem>>, vector<16x32xf32>
    %cst_3 = arith.constant 9.99999993E-9 : f32
    %4 = vector.broadcast %cst_3 : f32 to vector<16x32xf32>
    %5 = arith.addf %3, %4 : vector<16x32xf32>
    %cst_4 = arith.constant dense<0.000000e+00> : vector<8x16xf32>
    %6 = tpu.matmul %2, %5, %cst_4 {dimension_numbers = #tpu.dot_dimension_numbers<[1], [1], [0], [0], [0, 0, 1, 0], [], []>} : vector<8x32xf32>, vector<16x32xf32>, vector<8x16xf32> -> vector<8x16xf32>
    %cst_5 = arith.constant dense<0.000000e+00> : vector<8xf32>
    %7 = vector.multi_reduction <add>, %6, %cst_5 [1] : vector<8x16xf32> to vector<8xf32>
    %8 = vector.shape_cast %7 : vector<8xf32> to vector<8x1xf32>
    %c0_i32 = arith.constant 0 : i32
    %9 = arith.cmpi eq, %arg1, %c0_i32 : i32
    %10 = arith.extui %9 : i1 to i32
    %c0_i32_6 = arith.constant 0 : i32
    %11 = arith.cmpi ne, %10, %c0_i32_6 : i32
    scf.if %11 {
      %cst_13 = arith.constant 0.000000e+00 : f32
      %18 = vector.broadcast %cst_13 : f32 to vector<8x1xf32>
      %c0_14 = arith.constant 0 : index
      %c0_15 = arith.constant 0 : index
      %19 = vector.load %arg5[%c0_14, %c0_15] : memref<8x1xf32, #tpu.memory_space<vmem>>, vector<8x1xf32>
      tpu.vector_store %arg5[%c0_14, %c0_15], %18 {strides = array<i32>} : memref<8x1xf32, #tpu.memory_space<vmem>>, vector<8x1xf32>,
    } else {
    }
    %c0_7 = arith.constant 0 : index
    %c0_8 = arith.constant 0 : index
    %12 = vector.load %arg5[%c0_7, %c0_8] : memref<8x1xf32, #tpu.memory_space<vmem>>, vector<8x1xf32>
    %13 = arith.addf %12, %8 : vector<8x1xf32>
    %c0_9 = arith.constant 0 : index
    %c0_10 = arith.constant 0 : index
    %14 = vector.load %arg5[%c0_9, %c0_10] : memref<8x1xf32, #tpu.memory_space<vmem>>, vector<8x1xf32>
    tpu.vector_store %arg5[%c0_9, %c0_10], %13 {strides = array<i32>} : memref<8x1xf32, #tpu.memory_space<vmem>>, vector<8x1xf32>,
    %c0_i32_11 = arith.constant 0 : i32
    %15 = arith.cmpi eq, %arg1, %c0_i32_11 : i32
    %16 = arith.extui %15 : i1 to i32
    %c0_i32_12 = arith.constant 0 : i32
    %17 = arith.cmpi ne, %16, %c0_i32_12 : i32
    scf.if %17 {
      %c0_13 = arith.constant 0 : index
      %c0_14 = arith.constant 0 : index
      %18 = vector.load %arg4[%c0_13, %c0_14] : memref<8x32xf32, #tpu.memory_space<vmem>>, vector<8x32xf32>
      %cst_15 = arith.constant 9.99999993E-9 : f32
      %19 = vector.broadcast %cst_15 : f32 to vector<8x32xf32>
      %20 = arith.addf %18, %19 : vector<8x32xf32>
      %21 = arith.mulf %2, %2 : vector<8x32xf32>
      %cst_16 = arith.constant dense<0.000000e+00> : vector<8xf32>
      %22 = vector.multi_reduction <add>, %21, %cst_16 [1] : vector<8x32xf32> to vector<8xf32>
      %23 = vector.shape_cast %22 : vector<8xf32> to vector<8x1xf32>
      %24 = arith.mulf %2, %20 : vector<8x32xf32>
      %cst_17 = arith.constant dense<0.000000e+00> : vector<8xf32>
      %25 = vector.multi_reduction <add>, %24, %cst_17 [1] : vector<8x32xf32> to vector<8xf32>
      %26 = vector.shape_cast %25 : vector<8xf32> to vector<8x1xf32>
      %c0_18 = arith.constant 0 : index
      %c0_19 = arith.constant 0 : index
      %27 = vector.load %arg5[%c0_18, %c0_19] : memref<8x1xf32, #tpu.memory_space<vmem>>, vector<8x1xf32>
      %28 = arith.subf %27, %23 : vector<8x1xf32>
      %29 = math.log %28 : vector<8x1xf32>
      %30 = math.log %26 : vector<8x1xf32>
      %31 = arith.subf %29, %30 : vector<8x1xf32>
      %c0_20 = arith.constant 0 : index
      %c0_21 = arith.constant 0 : index
      %32 = vector.load %arg5[%c0_20, %c0_21] : memref<8x1xf32, #tpu.memory_space<vmem>>, vector<8x1xf32>
      tpu.vector_store %arg5[%c0_20, %c0_21], %31 {strides = array<i32>} : memref<8x1xf32, #tpu.memory_space<vmem>>, vector<8x1xf32>,
    } else {
    }
    return
  }
  func.func @transform_0(%arg0: i32, %arg1: i32) -> (i32, i32) {
    %c0_i32 = arith.constant 0 : i32
    %c0_i32_0 = arith.constant 0 : i32
    return %arg0, %c0_i32 : i32, i32
  }
  func.func @transform_1(%arg0: i32, %arg1: i32) -> (i32, i32) {
    %c0_i32 = arith.constant 0 : i32
    %c0_i32_0 = arith.constant 0 : i32
    return %arg1, %c0_i32 : i32, i32
  }
  func.func @transform_2(%arg0: i32, %arg1: i32) -> (i32, i32) {
    %c1_i32 = arith.constant 1 : i32
    %0 = arith.addi %arg0, %c1_i32 : i32
    %c2_i32 = arith.constant 2 : i32
    %c0_i32 = arith.constant 0 : i32
    %1 = arith.cmpi eq, %c2_i32, %c0_i32 : i32
    %c1_i32_0 = arith.constant 1 : i32
    %2 = arith.select %1, %c1_i32_0, %c2_i32 : i32
    %3 = arith.remsi %0, %2 : i32
    %c0_i32_1 = arith.constant 0 : i32
    %4 = arith.cmpi ne, %3, %c0_i32_1 : i32
    %c0_i32_2 = arith.constant 0 : i32
    %5 = arith.cmpi slt, %3, %c0_i32_2 : i32
    %c0_i32_3 = arith.constant 0 : i32
    %6 = arith.cmpi slt, %2, %c0_i32_3 : i32
    %7 = arith.xori %5, %6 : i1
    %8 = arith.andi %7, %4 : i1
    %9 = arith.addi %3, %2 : i32
    %10 = arith.select %8, %9, %3 : i32
    %c0_i32_4 = arith.constant 0 : i32
    %c0_i32_5 = arith.constant 0 : i32
    return %10, %c0_i32_4 : i32, i32
  }
  func.func @transform_3(%arg0: i32, %arg1: i32) -> (i32, i32) {
    %c0_i32 = arith.constant 0 : i32
    %c0_i32_0 = arith.constant 0 : i32
    return %arg0, %c0_i32 : i32, i32
  }
}

</mosaic_0001>

<llo_original>
// kernel: custom_infonce.1
$region0: #{custom_infonce.1}
  #allocation0 [shape = 'u32[]', space=smem, size = 0x4, offset = 0x4, fixed_abs, tag = 'smem constant byte address 0x4 - core index']
  #allocation1 [shape = 'u32[144,128]{1,0:T(1,128)}', space=vmem, size = 0x12000, scoped, tag = 'internal scratch']
  %s0 = inlined_call_operand.vmem [shape: f32[16,32], index: 0, kind: input, shape index: {}, may-alias: {0,1,2}]
  %s1 = inlined_call_operand.vmem [shape: f32[16,32], index: 1, kind: input, shape index: {}, may-alias: {0,1,2}]
  %s2 = inlined_call_operand.vmem [shape: f32[16,32], index: 2, kind: input, shape index: {}, may-alias: {0,1,2}]
  %s3 = inlined_call_operand.vmem [shape: f32[16,1], index: 3, kind: output, shape index: {}]
  %s4 = sld [smem:[#allocation0]]
  $region53: #{custom_infonce.1} parent=0
    _
  %s6 = ssub.s32 1, %s4
  %s7 = scalar_select 0, %s6, %s4
  loop: start=0, step=1, limit=4
  $region2: #{custom_infonce.1} parent=0 // loop_pre_header
    _
  $region3: #{custom_infonce.1} parent=0 // loop_header
    %s9 = sphi 0, %s13
    %p10 = scmp.ge.s32.totalorder %s9, 4
    %s16 = sphi 0, %s28
    %s17 = sphi 0, %s24
    %s18 = sphi 0, %s16
    %s19 = sphi 0, %s17
    %s20 = sphi 0, %s18
    %s21 = sphi 0, %s19
    %s31 = sphi 0, %s33
    %s34 = sphi 0, %s31
    %s35 = sphi 0, %s34
    %s51 = sphi 0, %s35
    %s57 = sphi 0, %s59
    %s60 = sphi 0, %s57
    %s61 = sphi 0, %s60
    %s77 = sphi 0, %s61
    %s109 = sphi 0, %s111
    %s112 = sphi 0, %s109
    %s113 = sphi 0, %s112
    %s129 = sphi 0, %s113
    %s135 = sphi 0, %s137
    %s138 = sphi 0, %s135
    %s139 = sphi 0, %s138
    %s155 = sphi 0, %s139
  $region4: #{custom_infonce.1} parent=0 // loop_header_branch
    %12 = sbr.rel (%p10) target = $region8
  $region5: #{custom_infonce.1} parent=0 // loop_body
    %s14 = ssub.s32 %s9, 1
    %s15 = ssub.s32 %s9, 2
    %s22 = sadd.s32 1, %s17
    %p23 = scmp.ge.s32.totalorder %s22, 1
    %s24 = scalar_select %p23, 0, %s22
    %s25 = sadd.s32 1, %s16
    %s26 = scalar_select %p23, %s25, %s16
    %p27 = scmp.ge.s32.totalorder %s26, 2
    %s28 = scalar_select %p27, 0, %s26
    %s29 = ssub.s32 %s16, %s28
    %p30 = scmp.eq.s32.totalorder %s29, 0
    %s32 = sadd.s32 %s31, 1
    %s33 = scalar_select %p30, %s31, %s32
    %p36 = pneg %p30
    %p37 = scmp.eq.s32.totalorder %s9, 1
    %p38 = por %p36, %p37
    %p39 = scmp.ne.s32.totalorder %s31, %s34
    %p40 = scmp.eq.s32.totalorder %s9, 0
    %p41 = por %p39, %p40
    %p42 = scmp.ne.s32.totalorder %s31, %s34
    %p43 = scmp.eq.s32.totalorder %s14, 1
    %p44 = por %p42, %p43
    %p45 = scmp.ne.s32.totalorder %s34, %s35
    %p46 = scmp.eq.s32.totalorder %s14, 0
    %p47 = por %p45, %p46
    %p48 = scmp.ne.s32.totalorder %s34, %s35
    %p49 = scmp.eq.s32.totalorder %s15, 1
    %p50 = por %p48, %p49
    %p52 = scmp.ne.s32.totalorder %s35, %s51
    %p53 = scmp.eq.s32.totalorder %s15, 0
    %p54 = por %p52, %p53
    %s55 = ssub.s32 %s17, %s24
    %p56 = scmp.eq.s32.totalorder %s55, 0
    %s58 = sadd.s32 %s57, 1
    %s59 = scalar_select %p56, %s57, %s58
    %p62 = pneg %p56
    %p63 = scmp.eq.s32.totalorder %s9, 1
    %p64 = por %p62, %p63
    %p65 = scmp.ne.s32.totalorder %s57, %s60
    %p66 = scmp.eq.s32.totalorder %s9, 0
    %p67 = por %p65, %p66
    %p68 = scmp.ne.s32.totalorder %s57, %s60
    %p69 = scmp.eq.s32.totalorder %s14, 1
    %p70 = por %p68, %p69
    %p71 = scmp.ne.s32.totalorder %s60, %s61
    %p72 = scmp.eq.s32.totalorder %s14, 0
    %p73 = por %p71, %p72
    %p74 = scmp.ne.s32.totalorder %s60, %s61
    %p75 = scmp.eq.s32.totalorder %s15, 1
    %p76 = por %p74, %p75
    %p78 = scmp.ne.s32.totalorder %s61, %s77
    %p79 = scmp.eq.s32.totalorder %s15, 0
    %p80 = por %p78, %p79
    %s81 = sadd.s32 %s16, 1
    %p82 = scmp.lt.s32.totalorder %s81, 0
    %s83 = ssub.s32 0, %s81
    %s84 = scalar_select %p82, %s83, %s81
    %s85 = sand.u32 %s84, 1
    %s86 = ssub.s32 0, %s85
    %s87 = scalar_select %p82, %s86, %s85
    %p88 = scmp.ne.s32.totalorder %s87, 0
    %p89 = scmp.lt.s32.totalorder %s87, 0
    %p90 = pnand %p89, %p88
    %p91 = pneg %p90
    %s92 = sadd.s32 %s87, 2
    %s93 = scalar_select %p91, %s92, %s87
    %s94 = sadd.s32 %s28, 1
    %p95 = scmp.lt.s32.totalorder %s94, 0
    %s96 = ssub.s32 0, %s94
    %s97 = scalar_select %p95, %s96, %s94
    %s98 = sand.u32 %s97, 1
    %s99 = ssub.s32 0, %s98
    %s100 = scalar_select %p95, %s99, %s98
    %p101 = scmp.ne.s32.totalorder %s100, 0
    %p102 = scmp.lt.s32.totalorder %s100, 0
    %p103 = pnand %p102, %p101
    %p104 = pneg %p103
    %s105 = sadd.s32 %s100, 2
    %s106 = scalar_select %p104, %s105, %s100
    %s107 = ssub.s32 %s93, %s106
    %p108 = scmp.eq.s32.totalorder %s107, 0
    %s110 = sadd.s32 %s109, 1
    %s111 = scalar_select %p108, %s109, %s110
    %p114 = pneg %p108
    %p115 = scmp.eq.s32.totalorder %s9, 1
    %p116 = por %p114, %p115
    %p117 = scmp.ne.s32.totalorder %s109, %s112
    %p118 = scmp.eq.s32.totalorder %s9, 0
    %p119 = por %p117, %p118
    %p120 = scmp.ne.s32.totalorder %s109, %s112
    %p121 = scmp.eq.s32.totalorder %s14, 1
    %p122 = por %p120, %p121
    %p123 = scmp.ne.s32.totalorder %s112, %s113
    %p124 = scmp.eq.s32.totalorder %s14, 0
    %p125 = por %p123, %p124
    %p126 = scmp.ne.s32.totalorder %s112, %s113
    %p127 = scmp.eq.s32.totalorder %s15, 1
    %p128 = por %p126, %p127
    %p130 = scmp.ne.s32.totalorder %s113, %s129
    %p131 = scmp.eq.s32.totalorder %s15, 0
    %p132 = por %p130, %p131
    %s133 = ssub.s32 %s16, %s28
    %p134 = scmp.eq.s32.totalorder %s133, 0
    %s136 = sadd.s32 %s135, 1
    %s137 = scalar_select %p134, %s135, %s136
    %p140 = pneg %p134
    %p141 = scmp.eq.s32.totalorder %s9, 1
    %p142 = por %p140, %p141
    %p143 = scmp.ne.s32.totalorder %s135, %s138
    %p144 = scmp.eq.s32.totalorder %s9, 0
    %p145 = por %p143, %p144
    %p146 = scmp.ne.s32.totalorder %s135, %s138
    %p147 = scmp.eq.s32.totalorder %s14, 1
    %p148 = por %p146, %p147
    %p149 = scmp.ne.s32.totalorder %s138, %s139
    %p150 = scmp.eq.s32.totalorder %s14, 0
    %p151 = por %p149, %p150
    %p152 = scmp.ne.s32.totalorder %s138, %s139
    %p153 = scmp.eq.s32.totalorder %s15, 1
    %p154 = por %p152, %p153
    %p156 = scmp.ne.s32.totalorder %s139, %s155
    %p157 = scmp.eq.s32.totalorder %s15, 0
    %p158 = por %p156, %p157
    %p159 = scmp.le.s32.totalorder 1, %s9
    %p160 = scmp.lt.s32.totalorder %s9, 3
    %p161 = pnand %p159, %p160
    %p162 = pneg %p161
    // Predicated region
    $region9: #{custom_infonce.1} parent=5 // pred_check
      _
    $region10: #{custom_infonce.1} parent=5 // pred_check_branch
      %164 = sbr.rel (%p161) target = $region12
    $region11: #{custom_infonce.1} parent=5 // pred_region
      %s165 = ssub.s32 %s9, 1
      // Predicated region
      $region13: #{custom_infonce.1} parent=11 // pred_check
        %p166 = pneg %p73
      $region14: #{custom_infonce.1} parent=11 // pred_check_branch
        %168 = sbr.rel (%p166) target = $region16
      $region15: #{custom_infonce.1} parent=11 // pred_region
        %s169 = smul.u32 2, %s19
        %p170 = scmp.lt.s32.totalorder %s169, 1
        %s171 = scalar_select %p170, %s169, 1
        %s172 = smul.addr %s171, 8
        %s173 = scalar_lea.vmem %s1, %s172
        %s174 = smul.u32 2, %s19
      $region16: #{custom_infonce.1} parent=11 // pred_fallthru
        _
    $region12: #{custom_infonce.1} parent=5 // pred_fallthru
      _
    %p175 = scmp.lt.s32.totalorder %s9, 2
    // Predicated region
    $region17: #{custom_infonce.1} parent=5 // pred_check
      %p176 = pneg %p175
    $region18: #{custom_infonce.1} parent=5 // pred_check_branch
      %178 = sbr.rel (%p176) target = $region20
    $region19: #{custom_infonce.1} parent=5 // pred_region
      // Predicated region
      $region21: #{custom_infonce.1} parent=19 // pred_check
        %p179 = pneg %p41
      $region22: #{custom_infonce.1} parent=19 // pred_check_branch
        %181 = sbr.rel (%p179) target = $region24
      $region23: #{custom_infonce.1} parent=19 // pred_region
        %p182 = scmp.lt.s32.totalorder %s16, 1
        %s183 = scalar_select %p182, %s16, 1
        %s184 = smul.addr %s183, 8
        %s185 = scalar_lea.vmem %s0, %s184
      $region24: #{custom_infonce.1} parent=19 // pred_fallthru
        _
      // Predicated region
      $region25: #{custom_infonce.1} parent=19 // pred_check
        %p186 = pneg %p119
      $region26: #{custom_infonce.1} parent=19 // pred_check_branch
        %188 = sbr.rel (%p186) target = $region28
      $region27: #{custom_infonce.1} parent=19 // pred_region
        %s189 = sadd.s32 %s16, 1
        %p190 = scmp.lt.s32.totalorder %s189, 0
        %s191 = ssub.s32 0, %s189
        %s192 = scalar_select %p190, %s191, %s189
        %s193 = sand.u32 %s192, 1
        %s194 = ssub.s32 0, %s193
        %s195 = scalar_select %p190, %s194, %s193
        %p196 = scmp.ne.s32.totalorder %s195, 0
        %p197 = scmp.lt.s32.totalorder %s195, 0
        %p198 = pnand %p197, %p196
        %p199 = pneg %p198
        %s200 = sadd.s32 %s195, 2
        %s201 = scalar_select %p199, %s200, %s195
        %p202 = scmp.lt.s32.totalorder %s201, 1
        %s203 = scalar_select %p202, %s201, 1
        %s204 = smul.addr %s203, 8
        %s205 = scalar_lea.vmem %s2, %s204
        %s206 = sadd.s32 %s16, 1
        %p207 = scmp.lt.s32.totalorder %s206, 0
        %s208 = ssub.s32 0, %s206
        %s209 = scalar_select %p207, %s208, %s206
        %s210 = sand.u32 %s209, 1
        %s211 = ssub.s32 0, %s210
        %s212 = scalar_select %p207, %s211, %s210
        %p213 = scmp.ne.s32.totalorder %s212, 0
        %p214 = scmp.lt.s32.totalorder %s212, 0
        %p215 = pnand %p214, %p213
        %p216 = pneg %p215
        %s217 = sadd.s32 %s212, 2
        %s218 = scalar_select %p216, %s217, %s212
      $region28: #{custom_infonce.1} parent=19 // pred_fallthru
        _
    $region20: #{custom_infonce.1} parent=5 // pred_fallthru
      _
    %p219 = scmp.le.s32.totalorder 1, %s9
    %p220 = scmp.lt.s32.totalorder %s9, 3
    %p221 = pnand %p219, %p220
    %p222 = pneg %p221
    // Predicated region
    $region29: #{custom_infonce.1} parent=5 // pred_check
      _
    $region30: #{custom_infonce.1} parent=5 // pred_check_branch
      %224 = sbr.rel (%p221) target = $region32
    $region31: #{custom_infonce.1} parent=5 // pred_region
      %s225 = ssub.s32 %s9, 1
      %p226 = scmp.lt.s32.totalorder %s18, 1
      %s227 = scalar_select %p226, %s18, 1
      %s228 = smul.addr %s227, 8
      %s229 = scalar_lea.vmem %s0, %s228
      %p230 = pneg %p47
      %p231 = pneg %p44
      %s232 = smul.u32 2, %s19
      %p233 = scmp.lt.s32.totalorder %s232, 1
      %s234 = scalar_select %p233, %s232, 1
      %s235 = smul.addr %s234, 8
      %s236 = scalar_lea.vmem %s1, %s235
      %p237 = pneg %p73
      %p238 = pneg %p70
      %s239 = sadd.s32 %s18, 1
      %p240 = scmp.lt.s32.totalorder %s239, 0
      %s241 = ssub.s32 0, %s239
      %s242 = scalar_select %p240, %s241, %s239
      %s243 = sand.u32 %s242, 1
      %s244 = ssub.s32 0, %s243
      %s245 = scalar_select %p240, %s244, %s243
      %p246 = scmp.ne.s32.totalorder %s245, 0
      %p247 = scmp.lt.s32.totalorder %s245, 0
      %p248 = pnand %p247, %p246
      %p249 = pneg %p248
      %s250 = sadd.s32 %s245, 2
      %s251 = scalar_select %p249, %s250, %s245
      %p252 = scmp.lt.s32.totalorder %s251, 1
      %s253 = scalar_select %p252, %s251, 1
      %s254 = smul.addr %s253, 8
      %s255 = scalar_lea.vmem %s2, %s254
      %p256 = pneg %p125
      %p257 = pneg %p122
      %p258 = pneg %p151
      %p259 = pneg %p148
      %p260 = scmp.lt.s32.totalorder %s18, 1
      %s261 = scalar_select %p260, %s18, 1
      %s262 = smul.addr %s261, 8
      %s263 = scalar_lea.vmem %s3, %s262
      %p264 = scmp.lt.s32.totalorder %s18, 1
      %s265 = scalar_select %p264, %s18, 1
      %s266 = smul.addr %s265, 8
      %s267 = scalar_lea.vmem %s0, %s266
      %s268 = smul.u32 2, %s19
      %p269 = scmp.lt.s32.totalorder %s268, 1
      %s270 = scalar_select %p269, %s268, 1
      %s271 = smul.addr %s270, 8
      %s272 = scalar_lea.vmem %s1, %s271
      %s273 = smul.u32 2, %s19
      %s274 = sadd.s32 %s18, 1
      %p275 = scmp.lt.s32.totalorder %s274, 0
      %s276 = ssub.s32 0, %s274
      %s277 = scalar_select %p275, %s276, %s274
      %s278 = sand.u32 %s277, 1
      %s279 = ssub.s32 0, %s278
      %s280 = scalar_select %p275, %s279, %s278
      %p281 = scmp.ne.s32.totalorder %s280, 0
      %p282 = scmp.lt.s32.totalorder %s280, 0
      %p283 = pnand %p282, %p281
      %p284 = pneg %p283
      %s285 = sadd.s32 %s280, 2
      %s286 = scalar_select %p284, %s285, %s280
      %p287 = scmp.lt.s32.totalorder %s286, 1
      %s288 = scalar_select %p287, %s286, 1
      %s289 = smul.addr %s288, 8
      %s290 = scalar_lea.vmem %s2, %s289
      %s291 = sadd.s32 %s18, 1
      %p292 = scmp.lt.s32.totalorder %s291, 0
      %s293 = ssub.s32 0, %s291
      %s294 = scalar_select %p292, %s293, %s291
      %s295 = sand.u32 %s294, 1
      %s296 = ssub.s32 0, %s295
      %s297 = scalar_select %p292, %s296, %s295
      %p298 = scmp.ne.s32.totalorder %s297, 0
      %p299 = scmp.lt.s32.totalorder %s297, 0
      %p300 = pnand %p299, %p298
      %p301 = pneg %p300
      %s302 = sadd.s32 %s297, 2
      %s303 = scalar_select %p301, %s302, %s297
      %p304 = scmp.lt.s32.totalorder %s18, 1
      %s305 = scalar_select %p304, %s18, 1
      %s306 = smul.addr %s305, 8
      %s307 = scalar_lea.vmem %s3, %s306
      %v308 = vld [vmem:[%s267] sm:$0xff]
      %v309 = vadd.f32 %v308, 1e-08
      %v310 = vld [vmem:[%s272] sm:$0xff]
      %v311 = vld [vmem:[%s272 + $0x8] sm:$0xff]
      %v312 = vadd.f32 %v310, 1e-08
      %v313 = vadd.f32 %v311, 1e-08
      %vm314 = vcmask 261120
      %v316 = vsel %vm314, %v309, 0
      %v319 = vsel %vm314, %v312, 0
      %v322 = vsel %vm314, %v313, 0
      %324 = vmatprep.subr.mxu0 0.0
      %325 = vmatpush1.xpose.msra.mxu0 %v319
      %326 = vmatprep.subr.mxu0 0.0
      %327 = vmatpush1.xpose.msra.mxu0 %v322
      %328 = vmatprep.subr.mxu0 0.0
      %329 = vmatpush1.xpose.msra.mxu0 0.0
      %330 = vmatprep.subr.mxu0 0.0
      %331 = vmatpush1.xpose.msra.mxu0 0.0
      %332 = vmatprep.subr.mxu0 0.0
      %333 = vmatpush1.xpose.msra.mxu0 0.0
      %334 = vmatprep.subr.mxu0 0.0
      %335 = vmatpush1.xpose.msra.mxu0 0.0
      %336 = vmatprep.subr.mxu0 0.0
      %337 = vmatpush1.xpose.msra.mxu0 0.0
      %338 = vmatprep.subr.mxu0 0.0
      %339 = vmatpush1.xpose.msra.mxu0 0.0
      %340 = vmatprep.subr.mxu0 0.0
      %341 = vmatpush1.xpose.msra.mxu0 0.0
      %342 = vmatprep.subr.mxu0 0.0
      %343 = vmatpush1.xpose.msra.mxu0 0.0
      %344 = vmatprep.subr.mxu0 0.0
      %345 = vmatpush1.xpose.msra.mxu0 0.0
      %346 = vmatprep.subr.mxu0 0.0
      %347 = vmatpush1.xpose.msra.mxu0 0.0
      %348 = vmatprep.subr.mxu0 0.0
      %349 = vmatpush1.xpose.msra.mxu0 0.0
      %350 = vmatprep.subr.mxu0 0.0
      %351 = vmatpush1.xpose.msra.mxu0 0.0
      %352 = vmatprep.subr.mxu0 0.0
      %353 = vmatpush1.xpose.msra.mxu0 0.0
      %354 = vmatprep.subr.mxu0 0.0
      %355 = vmatpush1.xpose.msra.mxu0 0.0
      %356 = vmatprep.subr.mxu0 0.0
      %357 = vmatpush1.xpose.msra.mxu0 0.0
      %358 = vmatprep.subr.mxu0 0.0
      %359 = vmatpush1.xpose.msra.mxu0 0.0
      %360 = vmatprep.subr.mxu0 0.0
      %361 = vmatpush1.xpose.msra.mxu0 0.0
      %362 = vmatprep.subr.mxu0 0.0
      %363 = vmatpush1.xpose.msra.mxu0 0.0
      %364 = vmatprep.subr.mxu0 0.0
      %365 = vmatpush1.xpose.msra.mxu0 0.0
      %366 = vmatprep.subr.mxu0 0.0
      %367 = vmatpush1.xpose.msra.mxu0 0.0
      %368 = vmatprep.subr.mxu0 0.0
      %369 = vmatpush1.xpose.msra.mxu0 0.0
      %370 = vmatprep.subr.mxu0 0.0
      %371 = vmatpush1.xpose.msra.mxu0 0.0
      %372 = vmatprep.subr.mxu0 0.0
      %373 = vmatpush1.xpose.msra.mxu0 0.0
      %374 = vmatprep.subr.mxu0 0.0
      %375 = vmatpush1.xpose.msra.mxu0 0.0
      %376 = vmatprep.subr.mxu0 0.0
      %377 = vmatpush1.xpose.msra.mxu0 0.0
      %378 = vmatprep.subr.mxu0 0.0
      %379 = vmatpush1.xpose.msra.mxu0 0.0
      %380 = vmatprep.subr.mxu0 0.0
      %381 = vmatpush1.xpose.msra.mxu0 0.0
      %382 = vmatprep.subr.mxu0 0.0
      %383 = vmatpush1.xpose.msra.mxu0 0.0
      %384 = vmatprep.subr.mxu0 0.0
      %385 = vmatpush1.xpose.msra.mxu0 0.0
      %386 = vmatprep.subr.mxu0 0.0
      %387 = vmatpush1.xpose.msra.mxu0 0.0
      %388 = vmatprep.mubr.f32.mxu0 0.0
      %389 = vmatmul.mubr.f32.gmra.mrb[0].mxu0 %v316
      %v390 = vpop.f32.mrb[0].mxu0
      %v391 = vadd.f32 0.0, %v390
      %v392 = vpop.f32.mrb[0].mxu0
      %393 = vdwg.mxu0
      %vm394 = vcmask 130048
      %v395 = vsel %vm394, %v391, 0.0
      %396 = vadd.xlane.f32.xlu0 %v395
      %v397 = vpop.xlane.xlu0 %396
      %p398 = scmp.eq.s32.totalorder %s19, 0
      // Predicated region
      $region33: #{custom_infonce.1} parent=31 // pred_check
        %p399 = pneg %p398
      $region34: #{custom_infonce.1} parent=31 // pred_check_branch
        %401 = sbr.rel (%p399) target = $region36
      $region35: #{custom_infonce.1} parent=31 // pred_region
        %vm402 = vcmask 7168
        %403 = vst.msk [vmem:[%s307] sm:$0xff] %vm402, 0.0
      $region36: #{custom_infonce.1} parent=31 // pred_fallthru
        _
      %v404 = vld [vmem:[%s307] sm:$0xff]
      %v405 = vadd.f32 %v404, %v397
      %vm406 = vcmask 7168
      %407 = vst.msk [vmem:[%s307] sm:$0xff] %vm406, %v405
      // Predicated region
      $region37: #{custom_infonce.1} parent=31 // pred_check
        %p408 = pneg %p398
      $region38: #{custom_infonce.1} parent=31 // pred_check_branch
        %410 = sbr.rel (%p408) target = $region40
      $region39: #{custom_infonce.1} parent=31 // pred_region
        %v411 = vld [vmem:[%s290] sm:$0xff]
        %v412 = vadd.f32 %v411, 1e-08
        %v413 = vmul.f32 %v309, %v309
        %v414 = vsel %vm314, %v413, 0.0
        %415 = vadd.xlane.f32.xlu0 %v414
        %v416 = vpop.xlane.xlu0 %415
        %v417 = vmul.f32 %v309, %v412
        %v418 = vsel %vm314, %v417, 0.0
        %419 = vadd.xlane.f32.xlu0 %v418
        %v420 = vpop.xlane.xlu0 %419
        %v421 = vld [vmem:[%s307] sm:$0xff]
        %v422 = vsub.f32 %v421, %v416
        %v423 = vlog2.pop %v422
        %v424 = vmul.f32 %v423, 0.6931472
        %v425 = vlog2.pop %v420
        %v426 = vmul.f32 %v425, 0.6931472
        %v427 = vsub.f32 %v424, %v426
        %428 = vst.msk [vmem:[%s307] sm:$0xff] %vm406, %v427
      $region40: #{custom_infonce.1} parent=31 // pred_fallthru
        _
      %p429 = scmp.lt.s32.totalorder %s18, 1
      %s430 = scalar_select %p429, %s18, 1
      %s431 = smul.addr %s430, 8
      %s432 = scalar_lea.vmem %s3, %s431
      // Predicated region
      $region41: #{custom_infonce.1} parent=31 // pred_check
        %p433 = pneg %p148
      $region42: #{custom_infonce.1} parent=31 // pred_check_branch
        %435 = sbr.rel (%p433) target = $region44
      $region43: #{custom_infonce.1} parent=31 // pred_region
        _
      $region44: #{custom_infonce.1} parent=31 // pred_fallthru
        _
    $region32: #{custom_infonce.1} parent=5 // pred_fallthru
      _
    %p436 = scmp.le.s32.totalorder 2, %s9
    // Predicated region
    $region45: #{custom_infonce.1} parent=5 // pred_check
      %p437 = pneg %p436
    $region46: #{custom_infonce.1} parent=5 // pred_check_branch
      %439 = sbr.rel (%p437) target = $region48
    $region47: #{custom_infonce.1} parent=5 // pred_region
      %s440 = ssub.s32 %s9, 2
      // Predicated region
      $region49: #{custom_infonce.1} parent=47 // pred_check
        %p441 = pneg %p154
      $region50: #{custom_infonce.1} parent=47 // pred_check_branch
        %443 = sbr.rel (%p441) target = $region52
      $region51: #{custom_infonce.1} parent=47 // pred_region
        %p444 = scmp.lt.s32.totalorder %s20, 1
        %s445 = scalar_select %p444, %s20, 1
        %s446 = smul.addr %s445, 8
        %s447 = scalar_lea.vmem %s3, %s446
      $region52: #{custom_infonce.1} parent=47 // pred_fallthru
        _
    $region48: #{custom_infonce.1} parent=5 // pred_fallthru
      _
  $region6: #{custom_infonce.1} parent=0 // loop_footer
    %s13 = sadd.s32 1, %s9
  $region7: #{custom_infonce.1} parent=0 // loop_footer_branch
    %8 = sbr.rel target = $region3
  $region8: #{custom_infonce.1} parent=0 // loop_exit
    _

</llo_original>
